<compile_context>
chip_gen: v5e
topology: v5e:2x2
jax: 0.10.0
libtpu: 0.0.40
codegen_flags: <defaults>
</compile_context>

<pallas_src>
import jax
import jax.numpy as jnp
from jax.experimental import pallas as pl
from jax.experimental.pallas import tpu as pltpu

OUT_LANES = 128  # lane-dense output slab width; q lives in lane 0


def _round_up(x, m):
    return ((x + m - 1) // m) * m


def _critic_kernel(s_ref, a_ref, w1s_ref, w1a_ref, b1_ref, w2_ref, b2_ref,
                   w3_ref, b3_ref, out_ref):
    # Fused concat: h1 = state @ W1_s + action @ W1_a + b1   (f32 accumulation on MXU)
    h1 = jnp.dot(s_ref[...], w1s_ref[...], preferred_element_type=jnp.float32)
    h1 = h1 + jnp.dot(a_ref[...], w1a_ref[...], preferred_element_type=jnp.float32)
    h1 = jnp.maximum(h1 + b1_ref[...], 0.0)                 # bias + ReLU in f32 (VPU)
    h1 = h1.astype(w2_ref.dtype)

    h2 = jnp.dot(h1, w2_ref[...], preferred_element_type=jnp.float32)
    h2 = jnp.maximum(h2 + b2_ref[...], 0.0)
    h2 = h2.astype(w3_ref.dtype)

    # Final layer: W3 zero-padded to OUT_LANES columns -> full-width, unmasked stores.
    q = jnp.dot(h2, w3_ref[...], preferred_element_type=jnp.float32)
    out_ref[...] = (q + b3_ref[...]).astype(out_ref.dtype)


def critic_forward(state, action, params, *, block_b=None, compute_dtype=jnp.float32):
    """Fused Critic forward. Returns (B, 1) f32 Q-values.

    params = (w1s, w1a, b1, w2, b2, w3_padded, b3_padded) in kernel-ready layout
    (weights (in, out); final layer zero-padded to OUT_LANES columns).
    """
    w1s, w1a, b1, w2, b2, w3p, b3p = params
    state = state.astype(jnp.float32)
    action = action.astype(jnp.float32)
    B, state_dim = state.shape
    _, action_dim = action.shape
    density = w2.shape[0]

    cdt = jnp.dtype(compute_dtype)
    if block_b is None:
        # 256-row tiles match v6e/v7x 256-wide MXU (bf16); 128 matches v5e's 4x128x128 MXU.
        block_b = 256 if cdt == jnp.dtype(jnp.bfloat16) else 128
    TM = _round_up(min(block_b, _round_up(B, 8)), 8)
    Bp = _round_up(B, TM)
    if Bp != B:  # pad batch so the grid tiles evenly; padded rows are sliced off below
        pad = Bp - B
        state = jnp.pad(state, ((0, pad), (0, 0)))
        action = jnp.pad(action, ((0, pad), (0, 0)))

    # MXU operands in compute dtype; biases + accumulation stay f32.
    s_c = state.astype(cdt)
    a_c = action.astype(cdt)
    w1s_c, w1a_c, w2_c, w3_c = (w.astype(cdt) for w in (w1s, w1a, w2, w3p))

    grid = (Bp // TM,)
    flops = 2 * Bp * density * (state_dim + action_dim + density + OUT_LANES)
    bytes_accessed = (
        Bp * (state_dim + action_dim) * s_c.dtype.itemsize
        + density * (state_dim + action_dim + density + OUT_LANES) * w2_c.dtype.itemsize
        + (2 * density + OUT_LANES) * 4
        + Bp * OUT_LANES * 4
    )

    out = pl.pallas_call(
        _critic_kernel,
        out_shape=jax.ShapeDtypeStruct((Bp, OUT_LANES), jnp.float32),
        grid=grid,
        in_specs=[
            pl.BlockSpec((TM, state_dim), lambda i: (i, 0)),        # state tile
            pl.BlockSpec((TM, action_dim), lambda i: (i, 0)),       # action tile
            pl.BlockSpec((state_dim, density), lambda i: (0, 0)),   # W1_state (resident)
            pl.BlockSpec((action_dim, density), lambda i: (0, 0)),  # W1_action (resident)
            pl.BlockSpec((1, density), lambda i: (0, 0)),           # b1
            pl.BlockSpec((density, density), lambda i: (0, 0)),     # W2 (resident)
            pl.BlockSpec((1, density), lambda i: (0, 0)),           # b2
            pl.BlockSpec((density, OUT_LANES), lambda i: (0, 0)),   # W3 padded (resident)
            pl.BlockSpec((1, OUT_LANES), lambda i: (0, 0)),         # b3 padded
        ],
        out_specs=pl.BlockSpec((TM, OUT_LANES), lambda i: (i, 0)),
        compiler_params=pltpu.CompilerParams(
            dimension_semantics=("parallel",)),                     # 2-TC sharding on v7x
        cost_estimate=pl.CostEstimate(
            flops=flops, transcendentals=0, bytes_accessed=bytes_accessed),
    )(s_c, a_c, w1s_c, w1a_c, b1, w2_c, b2, w3_c, b3p)

    return out[:B, :1]


def init_critic_params(key, state_dim, action_dim, density=512):
    """Deterministic synthetic init (PyTorch-Linear-style uniform fan-in scaling),
    returned directly in kernel-ready layout:
      W1 split into (state_dim, density) + (action_dim, density), biases (1, out),
      final layer zero-padded to (density, OUT_LANES) / (1, OUT_LANES)."""
    input_dim = state_dim + action_dim
    k1, k2, k3, k4, k5, k6 = jax.random.split(key, 6)

    def lin(kw, kb, fan_in, fan_out):
        bound = 1.0 / jnp.sqrt(jnp.float32(fan_in))
        w = jax.random.uniform(kw, (fan_in, fan_out), jnp.float32, -bound, bound)
        b = jax.random.uniform(kb, (1, fan_out), jnp.float32, -bound, bound)
        return w, b

    w1, b1 = lin(k1, k2, input_dim, density)
    w2, b2 = lin(k3, k4, density, density)
    w3, b3 = lin(k5, k6, density, 1)

    w1s, w1a = w1[:state_dim], w1[state_dim:]
    w3p = jnp.zeros((density, OUT_LANES), jnp.float32).at[:, :1].set(w3)
    b3p = jnp.zeros((1, OUT_LANES), jnp.float32).at[:, :1].set(b3)
    return (w1s, w1a, b1, w2, b2, w3p, b3p)


def critic_reference(state, action, params):
    """Pure-JAX f32 reference mirroring the PyTorch forward."""
    w1s, w1a, b1, w2, b2, w3p, b3p = params
    x = jnp.concatenate([state, action], axis=1)                    # hstack
    w1 = jnp.concatenate([w1s, w1a], axis=0)
    h1 = jnp.maximum(x @ w1 + b1, 0.0)
    h2 = jnp.maximum(h1 @ w2 + b2, 0.0)
    return h2 @ w3p[:, :1] + b3p[:, :1]


if __name__ == "__main__":
    batch = 13          # deliberately NOT a multiple of 8 -> exercises the padding path
    state_dim = 24
    action_dim = 8
    density = 512       # PyTorch module default

    key = jax.random.PRNGKey(0)
    kp, ks, ka = jax.random.split(key, 3)

    params = init_critic_params(kp, state_dim, action_dim, density)
    state = jax.random.normal(ks, (batch, state_dim), jnp.float32)
    action = jax.random.normal(ka, (batch, action_dim), jnp.float32)

    ref = critic_reference(state, action, params)

    # f32 MXU path (v5e-friendly): exact match vs reference.
    out_f32 = jax.block_until_ready(critic_forward(state, action, params))
    assert out_f32.shape == (batch, 1)
    assert jnp.allclose(out_f32, ref, atol=1e-5, rtol=1e-5), "f32 mismatch vs reference"

    # bf16-fed MXU path (v6e/v7x throughput path, f32 accumulation): loose tolerance.
    out_bf16 = jax.block_until_ready(
        critic_forward(state, action, params, compute_dtype=jnp.bfloat16))
    assert out_bf16.shape == (batch, 1)
    assert jnp.allclose(out_bf16, ref, atol=5e-2, rtol=5e-2), "bf16 mismatch vs reference"

    print("KERNEL_OK")
</pallas_src>

<mosaic_0001>
module attributes {stable_mosaic.version = 11 : i64} {
  func.func @_critic_kernel(%arg0: i32, %arg1: memref<16x24xf32, #tpu.memory_space<vmem>>, %arg2: memref<16x8xf32, #tpu.memory_space<vmem>>, %arg3: memref<24x512xf32, #tpu.memory_space<vmem>>, %arg4: memref<8x512xf32, #tpu.memory_space<vmem>>, %arg5: memref<1x512xf32, #tpu.memory_space<vmem>>, %arg6: memref<512x512xf32, #tpu.memory_space<vmem>>, %arg7: memref<1x512xf32, #tpu.memory_space<vmem>>, %arg8: memref<512x128xf32, #tpu.memory_space<vmem>>, %arg9: memref<1x128xf32, #tpu.memory_space<vmem>>, %arg10: memref<16x128xf32, #tpu.memory_space<vmem>>) attributes {dimension_semantics = [#tpu.dimension_semantics<parallel>], iteration_bounds = array<i64: 1>, scalar_prefetch = 0 : i64, scratch_operands = 0 : i64, tpu.core_type = #tpu.core_type<tc>, window_params = [{transform_indices = @transform_0, window_bounds = array<i64: 16, 24>}, {transform_indices = @transform_1, window_bounds = array<i64: 16, 8>}, {pipeline_mode = #tpu.pipeline_mode<synchronous>, transform_indices = @transform_2, window_bounds = array<i64: 24, 512>}, {pipeline_mode = #tpu.pipeline_mode<synchronous>, transform_indices = @transform_3, window_bounds = array<i64: 8, 512>}, {pipeline_mode = #tpu.pipeline_mode<synchronous>, transform_indices = @transform_4, window_bounds = array<i64: 1, 512>}, {pipeline_mode = #tpu.pipeline_mode<synchronous>, transform_indices = @transform_5, window_bounds = array<i64: 512, 512>}, {pipeline_mode = #tpu.pipeline_mode<synchronous>, transform_indices = @transform_6, window_bounds = array<i64: 1, 512>}, {pipeline_mode = #tpu.pipeline_mode<synchronous>, transform_indices = @transform_7, window_bounds = array<i64: 512, 128>}, {pipeline_mode = #tpu.pipeline_mode<synchronous>, transform_indices = @transform_8, window_bounds = array<i64: 1, 128>}, {transform_indices = @transform_9, window_bounds = array<i64: 16, 128>}]} {
    %c0 = arith.constant 0 : index
    %c0_0 = arith.constant 0 : index
    %0 = vector.load %arg1[%c0, %c0_0] : memref<16x24xf32, #tpu.memory_space<vmem>>, vector<16x24xf32>
    %c0_1 = arith.constant 0 : index
    %c0_2 = arith.constant 0 : index
    %1 = vector.load %arg3[%c0_1, %c0_2] : memref<24x512xf32, #tpu.memory_space<vmem>>, vector<24x512xf32>
    %cst = arith.constant dense<0.000000e+00> : vector<16x512xf32>
    %2 = tpu.matmul %0, %1, %cst {dimension_numbers = #tpu.dot_dimension_numbers<[1], [0], [0], [1], [0, 0, 1, 1], [], []>} : vector<16x24xf32>, vector<24x512xf32>, vector<16x512xf32> -> vector<16x512xf32>
    %c0_3 = arith.constant 0 : index
    %c0_4 = arith.constant 0 : index
    %3 = vector.load %arg2[%c0_3, %c0_4] : memref<16x8xf32, #tpu.memory_space<vmem>>, vector<16x8xf32>
    %c0_5 = arith.constant 0 : index
    %c0_6 = arith.constant 0 : index
    %4 = vector.load %arg4[%c0_5, %c0_6] : memref<8x512xf32, #tpu.memory_space<vmem>>, vector<8x512xf32>
    %cst_7 = arith.constant dense<0.000000e+00> : vector<16x512xf32>
    %5 = tpu.matmul %3, %4, %cst_7 {dimension_numbers = #tpu.dot_dimension_numbers<[1], [0], [0], [1], [0, 0, 1, 1], [], []>} : vector<16x8xf32>, vector<8x512xf32>, vector<16x512xf32> -> vector<16x512xf32>
    %6 = arith.addf %2, %5 : vector<16x512xf32>
    %c0_8 = arith.constant 0 : index
    %c0_9 = arith.constant 0 : index
    %7 = vector.load %arg5[%c0_8, %c0_9] : memref<1x512xf32, #tpu.memory_space<vmem>>, vector<1x512xf32>
    %8 = vector.broadcast %7 : vector<1x512xf32> to vector<16x512xf32>
    %9 = arith.addf %6, %8 : vector<16x512xf32>
    %cst_10 = arith.constant 0.000000e+00 : f32
    %10 = vector.broadcast %cst_10 : f32 to vector<16x512xf32>
    %11 = arith.maximumf %9, %10 : vector<16x512xf32>
    %c0_11 = arith.constant 0 : index
    %c0_12 = arith.constant 0 : index
    %12 = vector.load %arg6[%c0_11, %c0_12] : memref<512x512xf32, #tpu.memory_space<vmem>>, vector<512x512xf32>
    %cst_13 = arith.constant dense<0.000000e+00> : vector<16x512xf32>
    %13 = tpu.matmul %11, %12, %cst_13 {dimension_numbers = #tpu.dot_dimension_numbers<[1], [0], [0], [1], [0, 0, 1, 1], [], []>} : vector<16x512xf32>, vector<512x512xf32>, vector<16x512xf32> -> vector<16x512xf32>
    %c0_14 = arith.constant 0 : index
    %c0_15 = arith.constant 0 : index
    %14 = vector.load %arg7[%c0_14, %c0_15] : memref<1x512xf32, #tpu.memory_space<vmem>>, vector<1x512xf32>
    %15 = vector.broadcast %14 : vector<1x512xf32> to vector<16x512xf32>
    %16 = arith.addf %13, %15 : vector<16x512xf32>
    %cst_16 = arith.constant 0.000000e+00 : f32
    %17 = vector.broadcast %cst_16 : f32 to vector<16x512xf32>
    %18 = arith.maximumf %16, %17 : vector<16x512xf32>
    %c0_17 = arith.constant 0 : index
    %c0_18 = arith.constant 0 : index
    %19 = vector.load %arg8[%c0_17, %c0_18] : memref<512x128xf32, #tpu.memory_space<vmem>>, vector<512x128xf32>
    %cst_19 = arith.constant dense<0.000000e+00> : vector<16x128xf32>
    %20 = tpu.matmul %18, %19, %cst_19 {dimension_numbers = #tpu.dot_dimension_numbers<[1], [0], [0], [1], [0, 0, 1, 1], [], []>} : vector<16x512xf32>, vector<512x128xf32>, vector<16x128xf32> -> vector<16x128xf32>
    %c0_20 = arith.constant 0 : index
    %c0_21 = arith.constant 0 : index
    %21 = vector.load %arg9[%c0_20, %c0_21] : memref<1x128xf32, #tpu.memory_space<vmem>>, vector<1x128xf32>
    %22 = vector.broadcast %21 : vector<1x128xf32> to vector<16x128xf32>
    %23 = arith.addf %20, %22 : vector<16x128xf32>
    %c0_22 = arith.constant 0 : index
    %c0_23 = arith.constant 0 : index
    %24 = vector.load %arg10[%c0_22, %c0_23] : memref<16x128xf32, #tpu.memory_space<vmem>>, vector<16x128xf32>
    tpu.vector_store %arg10[%c0_22, %c0_23], %23 {strides = array<i32>} : memref<16x128xf32, #tpu.memory_space<vmem>>, vector<16x128xf32>,
    return
  }
  func.func @transform_0(%arg0: i32) -> (i32, i32) {
    %c0_i32 = arith.constant 0 : i32
    %c0_i32_0 = arith.constant 0 : i32
    return %arg0, %c0_i32 : i32, i32
  }
  func.func @transform_1(%arg0: i32) -> (i32, i32) {
    %c0_i32 = arith.constant 0 : i32
    %c0_i32_0 = arith.constant 0 : i32
    return %arg0, %c0_i32 : i32, i32
  }
  func.func @transform_2(%arg0: i32) -> (i32, i32) {
    %c0_i32 = arith.constant 0 : i32
    %c0_i32_0 = arith.constant 0 : i32
    %c0_i32_1 = arith.constant 0 : i32
    return %c0_i32, %c0_i32_0 : i32, i32
  }
  func.func @transform_3(%arg0: i32) -> (i32, i32) {
    %c0_i32 = arith.constant 0 : i32
    %c0_i32_0 = arith.constant 0 : i32
    %c0_i32_1 = arith.constant 0 : i32
    return %c0_i32, %c0_i32_0 : i32, i32
  }
  func.func @transform_4(%arg0: i32) -> (i32, i32) {
    %c0_i32 = arith.constant 0 : i32
    %c0_i32_0 = arith.constant 0 : i32
    %c0_i32_1 = arith.constant 0 : i32
    return %c0_i32, %c0_i32_0 : i32, i32
  }
  func.func @transform_5(%arg0: i32) -> (i32, i32) {
    %c0_i32 = arith.constant 0 : i32
    %c0_i32_0 = arith.constant 0 : i32
    %c0_i32_1 = arith.constant 0 : i32
    return %c0_i32, %c0_i32_0 : i32, i32
  }
  func.func @transform_6(%arg0: i32) -> (i32, i32) {
    %c0_i32 = arith.constant 0 : i32
    %c0_i32_0 = arith.constant 0 : i32
    %c0_i32_1 = arith.constant 0 : i32
    return %c0_i32, %c0_i32_0 : i32, i32
  }
  func.func @transform_7(%arg0: i32) -> (i32, i32) {
    %c0_i32 = arith.constant 0 : i32
    %c0_i32_0 = arith.constant 0 : i32
    %c0_i32_1 = arith.constant 0 : i32
    return %c0_i32, %c0_i32_0 : i32, i32
  }
  func.func @transform_8(%arg0: i32) -> (i32, i32) {
    %c0_i32 = arith.constant 0 : i32
    %c0_i32_0 = arith.constant 0 : i32
    %c0_i32_1 = arith.constant 0 : i32
    return %c0_i32, %c0_i32_0 : i32, i32
  }
  func.func @transform_9(%arg0: i32) -> (i32, i32) {
    %c0_i32 = arith.constant 0 : i32
    %c0_i32_0 = arith.constant 0 : i32
    return %arg0, %c0_i32 : i32, i32
  }
}

</mosaic_0001>

<llo_original>
// kernel: tpu_custom_call.1
$region0: #{tpu_custom_call.1}
  #allocation0 [shape = 'u32[]', space=smem, size = 0x4, offset = 0x4, fixed_abs, tag = 'smem constant byte address 0x4 - core index']
  #allocation1 [shape = 'u32[72,128]{1,0:T(1,128)}', space=vmem, size = 0x9000, scoped, tag = 'internal scratch']
  %s0 = inlined_call_operand.vmem [shape: f32[16,24], index: 0, kind: input, shape index: {}]
  %s1 = inlined_call_operand.vmem [shape: f32[16,8], index: 1, kind: input, shape index: {}]
  %s2 = inlined_call_operand.hbm [shape: f32[24,512], index: 2, kind: input, shape index: {}]
  %s3 = inlined_call_operand.hbm [shape: f32[8,512], index: 3, kind: input, shape index: {}]
  %s4 = inlined_call_operand.vmem [shape: f32[1,512], index: 4, kind: input, shape index: {}]
  %s5 = inlined_call_operand.hbm [shape: f32[512,512], index: 5, kind: input, shape index: {}]
  %s6 = inlined_call_operand.vmem [shape: f32[1,512], index: 6, kind: input, shape index: {}]
  %s7 = inlined_call_operand.hbm [shape: f32[512,128], index: 7, kind: input, shape index: {}]
  %s8 = inlined_call_operand.vmem [shape: f32[1,128], index: 8, kind: input, shape index: {}]
  %s9 = inlined_call_operand.hbm [shape: f32[16,128], index: 9, kind: output, shape index: {}]
  %s10 = sld [smem:[#allocation0]]
  $region62: #{tpu_custom_call.1} parent=0
    _
  %s12 = ssub.s32 1, %s10
  %s13 = scalar_select 0, %s12, %s10
  $region1: #{tpu_custom_call.1} parent=0
    #allocation2 [shape = 'u8[49152]{0}', space=vmem, size = 0xc000, scoped, tag = 'input window, operand 2, single buffered']
    #allocation3 [shape = 's32[1]{0}', space=sflag, size = 0x4, scoped, tag = 'scoped memory for tpu_custom_call.1']
    #allocation4 [shape = 's32[1]{0}', space=sflag, size = 0x4, scoped, tag = 'scoped memory for tpu_custom_call.1']
    #allocation5 [shape = 'u8[16384]{0}', space=vmem, size = 0x4000, scoped, tag = 'input window, operand 3, single buffered']
    #allocation6 [shape = 's32[1]{0}', space=sflag, size = 0x4, scoped, tag = 'scoped memory for tpu_custom_call.1']
    #allocation7 [shape = 'u8[1048576]{0}', space=vmem, size = 0x100000, scoped, tag = 'input window, operand 5, single buffered']
    #allocation8 [shape = 'u8[262144]{0}', space=vmem, size = 0x40000, scoped, tag = 'input window, operand 7, single buffered']
    #allocation9 [shape = 's32[1]{0}', space=sflag, size = 0x4, scoped, tag = 'scoped memory for tpu_custom_call.1']
    #allocation10 [shape = 'u8[8192]{0}', space=vmem, size = 0x2000, scoped, tag = 'output window, operand 0, single buffered']
    %14 = vsyncpa [#allocation3], 0
    %15 = vsyncpa [#allocation6], 0
    %16 = vsyncpa [#allocation9], 0
    %17 = vsyncpa [#allocation4], 0
    // Predicated region
    $region2: #{tpu_custom_call.1} parent=1 // pred_check
      _
    $region3: #{tpu_custom_call.1} parent=1 // pred_check_branch
      %19 = sbr.rel (0) target = $region5
    $region4: #{tpu_custom_call.1} parent=1 // pred_region
      _
    $region5: #{tpu_custom_call.1} parent=1 // pred_fallthru
      _
    // Predicated region
    $region6: #{tpu_custom_call.1} parent=1 // pred_check
      _
    $region7: #{tpu_custom_call.1} parent=1 // pred_check_branch
      %21 = sbr.rel (0) target = $region9
    $region8: #{tpu_custom_call.1} parent=1 // pred_region
      _
    $region9: #{tpu_custom_call.1} parent=1 // pred_fallthru
      _
    // Predicated region
    $region10: #{tpu_custom_call.1} parent=1 // pred_check
      _
    $region11: #{tpu_custom_call.1} parent=1 // pred_check_branch
      %23 = sbr.rel (0) target = $region13
    $region12: #{tpu_custom_call.1} parent=1 // pred_region
      %25 = vsyncadd [#allocation3], 0
      %s26 = sshll.u32 %s2, 4
      %s27 = int_to_ptr.hbm [resolvable:$true] %s26
      %s28 = sshll.u32 [#allocation2], 4
      %s29 = int_to_ptr.vmem [resolvable:$true] %s28
      %34 = dma.hbm_to_vmem [thread:$0]  %s27, 1536, %s29, [#allocation3], 512, 512, 32
    $region13: #{tpu_custom_call.1} parent=1 // pred_fallthru
      _
    // Predicated region
    $region14: #{tpu_custom_call.1} parent=1 // pred_check
      _
    $region15: #{tpu_custom_call.1} parent=1 // pred_check_branch
      %36 = sbr.rel (0) target = $region17
    $region16: #{tpu_custom_call.1} parent=1 // pred_region
      %38 = vsyncadd [#allocation6], 0
      %s40 = sshll.u32 %s3, 4
      %s41 = int_to_ptr.hbm [resolvable:$true] %s40
      %s42 = sshll.u32 [#allocation5], 4
      %s43 = int_to_ptr.vmem [resolvable:$true] %s42
      %45 = dma.hbm_to_vmem [thread:$0]  %s41, 512, %s43, [#allocation6]
    $region17: #{tpu_custom_call.1} parent=1 // pred_fallthru
      _
    // Predicated region
    $region18: #{tpu_custom_call.1} parent=1 // pred_check
      _
    $region19: #{tpu_custom_call.1} parent=1 // pred_check_branch
      %47 = sbr.rel (0) target = $region21
    $region20: #{tpu_custom_call.1} parent=1 // pred_region
      _
    $region21: #{tpu_custom_call.1} parent=1 // pred_fallthru
      _
    // Predicated region
    $region22: #{tpu_custom_call.1} parent=1 // pred_check
      _
    $region23: #{tpu_custom_call.1} parent=1 // pred_check_branch
      %49 = sbr.rel (0) target = $region25
    $region24: #{tpu_custom_call.1} parent=1 // pred_region
      %51 = vsyncadd [#allocation6], 0
      %s52 = sshll.u32 %s5, 4
      %s53 = int_to_ptr.hbm [resolvable:$true] %s52
      %s54 = sshll.u32 [#allocation7], 4
      %s55 = int_to_ptr.vmem [resolvable:$true] %s54
      %60 = dma.hbm_to_vmem [thread:$0]  %s53, 32768, %s55, [#allocation6], 512, 512, 32
    $region25: #{tpu_custom_call.1} parent=1 // pred_fallthru
      _
    // Predicated region
    $region26: #{tpu_custom_call.1} parent=1 // pred_check
      _
    $region27: #{tpu_custom_call.1} parent=1 // pred_check_branch
      %62 = sbr.rel (0) target = $region29
    $region28: #{tpu_custom_call.1} parent=1 // pred_region
      _
    $region29: #{tpu_custom_call.1} parent=1 // pred_fallthru
      _
    // Predicated region
    $region30: #{tpu_custom_call.1} parent=1 // pred_check
      _
    $region31: #{tpu_custom_call.1} parent=1 // pred_check_branch
      %64 = sbr.rel (0) target = $region33
    $region32: #{tpu_custom_call.1} parent=1 // pred_region
      %66 = vsyncadd [#allocation9], 0
      %s67 = sshll.u32 %s7, 4
      %s68 = int_to_ptr.hbm [resolvable:$true] %s67
      %s69 = sshll.u32 [#allocation8], 4
      %s70 = int_to_ptr.vmem [resolvable:$true] %s69
      %75 = dma.hbm_to_vmem [thread:$0]  %s68, 8192, %s70, [#allocation9], 128, 128, 8
    $region33: #{tpu_custom_call.1} parent=1 // pred_fallthru
      _
    // Predicated region
    $region34: #{tpu_custom_call.1} parent=1 // pred_check
      _
    $region35: #{tpu_custom_call.1} parent=1 // pred_check_branch
      %77 = sbr.rel (0) target = $region37
    $region36: #{tpu_custom_call.1} parent=1 // pred_region
      _
    $region37: #{tpu_custom_call.1} parent=1 // pred_fallthru
      _
    // Predicated region
    $region38: #{tpu_custom_call.1} parent=1 // pred_check
      _
    $region39: #{tpu_custom_call.1} parent=1 // pred_check_branch
      %79 = sbr.rel (0) target = $region41
    $region40: #{tpu_custom_call.1} parent=1 // pred_region
      %81 = dma.done [#allocation3], 1536
    $region41: #{tpu_custom_call.1} parent=1 // pred_fallthru
      _
    // Predicated region
    $region42: #{tpu_custom_call.1} parent=1 // pred_check
      _
    $region43: #{tpu_custom_call.1} parent=1 // pred_check_branch
      %83 = sbr.rel (0) target = $region45
    $region44: #{tpu_custom_call.1} parent=1 // pred_region
      %85 = dma.done [#allocation6], 512
    $region45: #{tpu_custom_call.1} parent=1 // pred_fallthru
      _
    // Predicated region
    $region46: #{tpu_custom_call.1} parent=1 // pred_check
      _
    $region47: #{tpu_custom_call.1} parent=1 // pred_check_branch
      %87 = sbr.rel (0) target = $region49
    $region48: #{tpu_custom_call.1} parent=1 // pred_region
      %89 = dma.done [#allocation6], 32768
    $region49: #{tpu_custom_call.1} parent=1 // pred_fallthru
      _
    // Predicated region
    $region50: #{tpu_custom_call.1} parent=1 // pred_check
      _
    $region51: #{tpu_custom_call.1} parent=1 // pred_check_branch
      %91 = sbr.rel (0) target = $region53
    $region52: #{tpu_custom_call.1} parent=1 // pred_region
      %93 = dma.done [#allocation9], 8192
    $region53: #{tpu_custom_call.1} parent=1 // pred_fallthru
      _
    %v94 = vld [vmem:[%s0] sm:$0xff]
    %v95 = vld [vmem:[%s0 + $0x8] sm:$0xff]
    %v96 = vld [vmem:[#allocation2] sm:$0xff]
    %v97 = vld [vmem:[#allocation2 + $0x8] sm:$0xff]
    %v98 = vld [vmem:[#allocation2 + $0x10] sm:$0xff]
    %v99 = vld [vmem:[#allocation2 + $0x18] sm:$0xff]
    %v100 = vld [vmem:[#allocation2 + $0x20] sm:$0xff]
    %v101 = vld [vmem:[#allocation2 + $0x28] sm:$0xff]
    %v102 = vld [vmem:[#allocation2 + $0x30] sm:$0xff]
    %v103 = vld [vmem:[#allocation2 + $0x38] sm:$0xff]
    %v104 = vld [vmem:[#allocation2 + $0x40] sm:$0xff]
    %v105 = vld [vmem:[#allocation2 + $0x48] sm:$0xff]
    %v106 = vld [vmem:[#allocation2 + $0x50] sm:$0xff]
    %v107 = vld [vmem:[#allocation2 + $0x58] sm:$0xff]
    %v108 = vld [vmem:[%s1] sm:$0xff]
    %v109 = vld [vmem:[%s1 + $0x8] sm:$0xff]
    %v110 = vld [vmem:[#allocation5] sm:$0xff]
    %v111 = vld [vmem:[#allocation5 + $0x8] sm:$0xff]
    %v112 = vld [vmem:[#allocation5 + $0x10] sm:$0xff]
    %v113 = vld [vmem:[#allocation5 + $0x18] sm:$0xff]
    %vm114 = vcmask 64512
    %v116 = vsel %vm114, %v108, 0
    %v119 = vsel %vm114, %v109, 0
    %121 = vmatpush.msra.mxu0 0.0
    %122 = vmatpush.msra.mxu0 0.0
    %123 = vmatpush.msra.mxu0 0.0
    %124 = vmatpush.msra.mxu0 0.0
    %125 = vmatpush.msra.mxu0 0.0
    %126 = vmatpush.msra.mxu0 0.0
    %127 = vmatpush.msra.mxu0 0.0
    %128 = vmatpush.msra.mxu0 0.0
    %129 = vmatpush.msra.mxu0 0.0
    %130 = vmatpush.msra.mxu0 0.0
    %131 = vmatpush.msra.mxu0 0.0
    %132 = vmatpush.msra.mxu0 0.0
    %133 = vmatpush.msra.mxu0 0.0
    %134 = vmatpush.msra.mxu0 0.0
    %135 = vmatpush.msra.mxu0 0.0
    %136 = vmatpush.msra.mxu0 %v110
    %137 = vmatmul.f32.gmra.mxu0 %v116
    %v138 = vpop.f32.mrf.mxu0
    %v139 = vadd.f32 0.0, %v138
    %140 = vmatmul.f32.gmra.mxu0 %v119
    %v141 = vpop.f32.mrf.mxu0
    %v142 = vadd.f32 0.0, %v141
    %143 = vdwg.mxu0
    %144 = vmatpush.msra.mxu0 0.0
    %145 = vmatpush.msra.mxu0 0.0
    %146 = vmatpush.msra.mxu0 0.0
    %147 = vmatpush.msra.mxu0 0.0
    %148 = vmatpush.msra.mxu0 0.0
    %149 = vmatpush.msra.mxu0 0.0
    %150 = vmatpush.msra.mxu0 0.0
    %151 = vmatpush.msra.mxu0 0.0
    %152 = vmatpush.msra.mxu0 0.0
    %153 = vmatpush.msra.mxu0 0.0
    %154 = vmatpush.msra.mxu0 0.0
    %155 = vmatpush.msra.mxu0 0.0
    %156 = vmatpush.msra.mxu0 0.0
    %157 = vmatpush.msra.mxu0 0.0
    %158 = vmatpush.msra.mxu0 0.0
    %159 = vmatpush.msra.mxu0 %v111
    %160 = vmatmul.f32.gmra.mxu0 %v116
    %v161 = vpop.f32.mrf.mxu0
    %v162 = vadd.f32 0.0, %v161
    %163 = vmatmul.f32.gmra.mxu0 %v119
    %v164 = vpop.f32.mrf.mxu0
    %v165 = vadd.f32 0.0, %v164
    %166 = vdwg.mxu0
    %167 = vmatpush.msra.mxu0 0.0
    %168 = vmatpush.msra.mxu0 0.0
    %169 = vmatpush.msra.mxu0 0.0
    %170 = vmatpush.msra.mxu0 0.0
    %171 = vmatpush.msra.mxu0 0.0
    %172 = vmatpush.msra.mxu0 0.0
    %173 = vmatpush.msra.mxu0 0.0
    %174 = vmatpush.msra.mxu0 0.0
    %175 = vmatpush.msra.mxu0 0.0
    %176 = vmatpush.msra.mxu0 0.0
    %177 = vmatpush.msra.mxu0 0.0
    %178 = vmatpush.msra.mxu0 0.0
    %179 = vmatpush.msra.mxu0 0.0
    %180 = vmatpush.msra.mxu0 0.0
    %181 = vmatpush.msra.mxu0 0.0
    %182 = vmatpush.msra.mxu0 %v112
    %183 = vmatmul.f32.gmra.mxu0 %v116
    %v184 = vpop.f32.mrf.mxu0
    %v185 = vadd.f32 0.0, %v184
    %186 = vmatmul.f32.gmra.mxu0 %v119
    %v187 = vpop.f32.mrf.mxu0
    %v188 = vadd.f32 0.0, %v187
    %189 = vdwg.mxu0
    %190 = vmatpush.msra.mxu0 0.0
    %191 = vmatpush.msra.mxu0 0.0
    %192 = vmatpush.msra.mxu0 0.0
    %193 = vmatpush.msra.mxu0 0.0
    %194 = vmatpush.msra.mxu0 0.0
    %195 = vmatpush.msra.mxu0 0.0
    %196 = vmatpush.msra.mxu0 0.0
    %197 = vmatpush.msra.mxu0 0.0
    %198 = vmatpush.msra.mxu0 0.0
    %199 = vmatpush.msra.mxu0 0.0
    %200 = vmatpush.msra.mxu0 0.0
    %201 = vmatpush.msra.mxu0 0.0
    %202 = vmatpush.msra.mxu0 0.0
    %203 = vmatpush.msra.mxu0 0.0
    %204 = vmatpush.msra.mxu0 0.0
    %205 = vmatpush.msra.mxu0 %v113
    %206 = vmatmul.f32.gmra.mxu0 %v116
    %v207 = vpop.f32.mrf.mxu0
    %v208 = vadd.f32 0.0, %v207
    %209 = vmatmul.f32.gmra.mxu0 %v119
    %v210 = vpop.f32.mrf.mxu0
    %v211 = vadd.f32 0.0, %v210
    %212 = vdwg.mxu0
    %vm213 = vcmask 195584
    %v215 = vsel %vm213, %v94, 0
    %v218 = vsel %vm213, %v95, 0
    %220 = vmatpush.msra.mxu0 0.0
    %221 = vmatpush.msra.mxu0 0.0
    %222 = vmatpush.msra.mxu0 0.0
    %223 = vmatpush.msra.mxu0 0.0
    %224 = vmatpush.msra.mxu0 0.0
    %225 = vmatpush.msra.mxu0 0.0
    %226 = vmatpush.msra.mxu0 0.0
    %227 = vmatpush.msra.mxu0 0.0
    %228 = vmatpush.msra.mxu0 0.0
    %229 = vmatpush.msra.mxu0 0.0
    %230 = vmatpush.msra.mxu0 0.0
    %231 = vmatpush.msra.mxu0 0.0
    %232 = vmatpush.msra.mxu0 0.0
    %233 = vmatpush.msra.mxu0 %v104
    %234 = vmatpush.msra.mxu0 %v100
    %235 = vmatpush.msra.mxu0 %v96
    %236 = vmatmul.f32.gmra.mxu0 %v215
    %v237 = vpop.f32.mrf.mxu0
    %v238 = vadd.f32 %v139, %v237
    %239 = vmatmul.f32.gmra.mxu0 %v218
    %v240 = vpop.f32.mrf.mxu0
    %v241 = vadd.f32 %v142, %v240
    %242 = vdwg.mxu0
    %243 = vmatpush.msra.mxu0 0.0
    %244 = vmatpush.msra.mxu0 0.0
    %245 = vmatpush.msra.mxu0 0.0
    %246 = vmatpush.msra.mxu0 0.0
    %247 = vmatpush.msra.mxu0 0.0
    %248 = vmatpush.msra.mxu0 0.0
    %249 = vmatpush.msra.mxu0 0.0
    %250 = vmatpush.msra.mxu0 0.0
    %251 = vmatpush.msra.mxu0 0.0
    %252 = vmatpush.msra.mxu0 0.0
    %253 = vmatpush.msra.mxu0 0.0
    %254 = vmatpush.msra.mxu0 0.0
    %255 = vmatpush.msra.mxu0 0.0
    %256 = vmatpush.msra.mxu0 %v105
    %257 = vmatpush.msra.mxu0 %v101
    %258 = vmatpush.msra.mxu0 %v97
    %259 = vmatmul.f32.gmra.mxu0 %v215
    %v260 = vpop.f32.mrf.mxu0
    %v261 = vadd.f32 %v162, %v260
    %262 = vmatmul.f32.gmra.mxu0 %v218
    %v263 = vpop.f32.mrf.mxu0
    %v264 = vadd.f32 %v165, %v263
    %265 = vdwg.mxu0
    %266 = vmatpush.msra.mxu0 0.0
    %267 = vmatpush.msra.mxu0 0.0
    %268 = vmatpush.msra.mxu0 0.0
    %269 = vmatpush.msra.mxu0 0.0
    %270 = vmatpush.msra.mxu0 0.0
    %271 = vmatpush.msra.mxu0 0.0
    %272 = vmatpush.msra.mxu0 0.0
    %273 = vmatpush.msra.mxu0 0.0
    %274 = vmatpush.msra.mxu0 0.0
    %275 = vmatpush.msra.mxu0 0.0
    %276 = vmatpush.msra.mxu0 0.0
    %277 = vmatpush.msra.mxu0 0.0
    %278 = vmatpush.msra.mxu0 0.0
    %279 = vmatpush.msra.mxu0 %v106
    %280 = vmatpush.msra.mxu0 %v102
    %281 = vmatpush.msra.mxu0 %v98
    %282 = vmatmul.f32.gmra.mxu0 %v215
    %v283 = vpop.f32.mrf.mxu0
    %v284 = vadd.f32 %v185, %v283
    %285 = vmatmul.f32.gmra.mxu0 %v218
    %v286 = vpop.f32.mrf.mxu0
    %v287 = vadd.f32 %v188, %v286
    %288 = vdwg.mxu0
    %289 = vmatpush.msra.mxu0 0.0
    %290 = vmatpush.msra.mxu0 0.0
    %291 = vmatpush.msra.mxu0 0.0
    %292 = vmatpush.msra.mxu0 0.0
    %293 = vmatpush.msra.mxu0 0.0
    %294 = vmatpush.msra.mxu0 0.0
    %295 = vmatpush.msra.mxu0 0.0
    %296 = vmatpush.msra.mxu0 0.0
    %297 = vmatpush.msra.mxu0 0.0
    %298 = vmatpush.msra.mxu0 0.0
    %299 = vmatpush.msra.mxu0 0.0
    %300 = vmatpush.msra.mxu0 0.0
    %301 = vmatpush.msra.mxu0 0.0
    %302 = vmatpush.msra.mxu0 %v107
    %303 = vmatpush.msra.mxu0 %v103
    %304 = vmatpush.msra.mxu0 %v99
    %305 = vmatmul.f32.gmra.mxu0 %v215
    %v306 = vpop.f32.mrf.mxu0
    %v307 = vadd.f32 %v208, %v306
    %308 = vmatmul.f32.gmra.mxu0 %v218
    %v309 = vpop.f32.mrf.mxu0
    %v310 = vadd.f32 %v211, %v309
    %311 = vdwg.mxu0
    %v312 = vld [vmem:[%s4] sm:$0xf]
    %v314 = vperm.slane %v312, 0
    %v315 = vperm.slane %v312, 1
    %v316 = vperm.slane %v312, 2
    %v317 = vperm.slane %v312, 3
    %v322 = vadd.f32 %v238, %v314
    %v323 = vadd.f32 %v261, %v315
    %v324 = vadd.f32 %v284, %v316
    %v325 = vadd.f32 %v307, %v317
    %v326 = vadd.f32 %v241, %v314
    %v327 = vadd.f32 %v264, %v315
    %v328 = vadd.f32 %v287, %v316
    %v329 = vadd.f32 %v310, %v317
    %v330 = vmax.f32 %v322, 0.0
    %v331 = vmax.f32 %v323, 0.0
    %v332 = vmax.f32 %v324, 0.0
    %v333 = vmax.f32 %v325, 0.0
    %v334 = vmax.f32 %v326, 0.0
    %v335 = vmax.f32 %v327, 0.0
    %v336 = vmax.f32 %v328, 0.0
    %v337 = vmax.f32 %v329, 0.0
    %v338 = vld [vmem:[#allocation7] sm:$0xff]
    %v339 = vld [vmem:[#allocation7 + $0x8] sm:$0xff]
    %v340 = vld [vmem:[#allocation7 + $0x10] sm:$0xff]
    %v341 = vld [vmem:[#allocation7 + $0x18] sm:$0xff]
    %v342 = vld [vmem:[#allocation7 + $0x20] sm:$0xff]
    %v343 = vld [vmem:[#allocation7 + $0x28] sm:$0xff]
    %v344 = vld [vmem:[#allocation7 + $0x30] sm:$0xff]
    %v345 = vld [vmem:[#allocation7 + $0x38] sm:$0xff]
    %v346 = vld [vmem:[#allocation7 + $0x40] sm:$0xff]
    %v347 = vld [vmem:[#allocation7 + $0x48] sm:$0xff]
    %v348 = vld [vmem:[#allocation7 + $0x50] sm:$0xff]
    %v349 = vld [vmem:[#allocation7 + $0x58] sm:$0xff]
    %v350 = vld [vmem:[#allocation7 + $0x60] sm:$0xff]
    %v351 = vld [vmem:[#allocation7 + $0x68] sm:$0xff]
    %v352 = vld [vmem:[#allocation7 + $0x70] sm:$0xff]
    %v353 = vld [vmem:[#allocation7 + $0x78] sm:$0xff]
    %v354 = vld [vmem:[#allocation7 + $0x80] sm:$0xff]
    %v355 = vld [vmem:[#allocation7 + $0x88] sm:$0xff]
    %v356 = vld [vmem:[#allocation7 + $0x90] sm:$0xff]
    %v357 = vld [vmem:[#allocation7 + $0x98] sm:$0xff]
    %v358 = vld [vmem:[#allocation7 + $0xa0] sm:$0xff]
    %v359 = vld [vmem:[#allocation7 + $0xa8] sm:$0xff]
    %v360 = vld [vmem:[#allocation7 + $0xb0] sm:$0xff]
    %v361 = vld [vmem:[#allocation7 + $0xb8] sm:$0xff]
    %v362 = vld [vmem:[#allocation7 + $0xc0] sm:$0xff]
    %v363 = vld [vmem:[#allocation7 + $0xc8] sm:$0xff]
    %v364 = vld [vmem:[#allocation7 + $0xd0] sm:$0xff]
    %v365 = vld [vmem:[#allocation7 + $0xd8] sm:$0xff]
    %v366 = vld [vmem:[#allocation7 + $0xe0] sm:$0xff]
    %v367 = vld [vmem:[#allocation7 + $0xe8] sm:$0xff]
    %v368 = vld [vmem:[#allocation7 + $0xf0] sm:$0xff]
    %v369 = vld [vmem:[#allocation7 + $0xf8] sm:$0xff]
    %v370 = vld [vmem:[#allocation7 + $0x100] sm:$0xff]
    %v371 = vld [vmem:[#allocation7 + $0x108] sm:$0xff]
    %v372 = vld [vmem:[#allocation7 + $0x110] sm:$0xff]
    %v373 = vld [vmem:[#allocation7 + $0x118] sm:$0xff]
    %v374 = vld [vmem:[#allocation7 + $0x120] sm:$0xff]
    %v375 = vld [vmem:[#allocation7 + $0x128] sm:$0xff]
    %v376 = vld [vmem:[#allocation7 + $0x130] sm:$0xff]
    %v377 = vld [vmem:[#allocation7 + $0x138] sm:$0xff]
    %v378 = vld [vmem:[#allocation7 + $0x140] sm:$0xff]
    %v379 = vld [vmem:[#allocation7 + $0x148] sm:$0xff]
    %v380 = vld [vmem:[#allocation7 + $0x150] sm:$0xff]
    %v381 = vld [vmem:[#allocation7 + $0x158] sm:$0xff]
    %v382 = vld [vmem:[#allocation7 + $0x160] sm:$0xff]
    %v383 = vld [vmem:[#allocation7 + $0x168] sm:$0xff]
    %v384 = vld [vmem:[#allocation7 + $0x170] sm:$0xff]
    %v385 = vld [vmem:[#allocation7 + $0x178] sm:$0xff]
    %v386 = vld [vmem:[#allocation7 + $0x180] sm:$0xff]
    %v387 = vld [vmem:[#allocation7 + $0x188] sm:$0xff]
    %v388 = vld [vmem:[#allocation7 + $0x190] sm:$0xff]
    %v389 = vld [vmem:[#allocation7 + $0x198] sm:$0xff]
    %v390 = vld [vmem:[#allocation7 + $0x1a0] sm:$0xff]
    %v391 = vld [vmem:[#allocation7 + $0x1a8] sm:$0xff]
    %v392 = vld [vmem:[#allocation7 + $0x1b0] sm:$0xff]
    %v393 = vld [vmem:[#allocation7 + $0x1b8] sm:$0xff]
    %v394 = vld [vmem:[#allocation7 + $0x1c0] sm:$0xff]
    %v395 = vld [vmem:[#allocation7 + $0x1c8] sm:$0xff]
    %v396 = vld [vmem:[#allocation7 + $0x1d0] sm:$0xff]
    %v397 = vld [vmem:[#allocation7 + $0x1d8] sm:$0xff]
    %v398 = vld [vmem:[#allocation7 + $0x1e0] sm:$0xff]
    %v399 = vld [vmem:[#allocation7 + $0x1e8] sm:$0xff]
    %v400 = vld [vmem:[#allocation7 + $0x1f0] sm:$0xff]
    %v401 = vld [vmem:[#allocation7 + $0x1f8] sm:$0xff]
    %v402 = vld [vmem:[#allocation7 + $0x200] sm:$0xff]
    %v403 = vld [vmem:[#allocation7 + $0x208] sm:$0xff]
    %v404 = vld [vmem:[#allocation7 + $0x210] sm:$0xff]
    %v405 = vld [vmem:[#allocation7 + $0x218] sm:$0xff]
    %v406 = vld [vmem:[#allocation7 + $0x220] sm:$0xff]
    %v407 = vld [vmem:[#allocation7 + $0x228] sm:$0xff]
    %v408 = vld [vmem:[#allocation7 + $0x230] sm:$0xff]
    %v409 = vld [vmem:[#allocation7 + $0x238] sm:$0xff]
    %v410 = vld [vmem:[#allocation7 + $0x240] sm:$0xff]
    %v411 = vld [vmem:[#allocation7 + $0x248] sm:$0xff]
    %v412 = vld [vmem:[#allocation7 + $0x250] sm:$0xff]
    %v413 = vld [vmem:[#allocation7 + $0x258] sm:$0xff]
    %v414 = vld [vmem:[#allocation7 + $0x260] sm:$0xff]
    %v415 = vld [vmem:[#allocation7 + $0x268] sm:$0xff]
    %v416 = vld [vmem:[#allocation7 + $0x270] sm:$0xff]
    %v417 = vld [vmem:[#allocation7 + $0x278] sm:$0xff]
    %v418 = vld [vmem:[#allocation7 + $0x280] sm:$0xff]
    %v419 = vld [vmem:[#allocation7 + $0x288] sm:$0xff]
    %v420 = vld [vmem:[#allocation7 + $0x290] sm:$0xff]
    %v421 = vld [vmem:[#allocation7 + $0x298] sm:$0xff]
    %v422 = vld [vmem:[#allocation7 + $0x2a0] sm:$0xff]
    %v423 = vld [vmem:[#allocation7 + $0x2a8] sm:$0xff]
    %v424 = vld [vmem:[#allocation7 + $0x2b0] sm:$0xff]
    %v425 = vld [vmem:[#allocation7 + $0x2b8] sm:$0xff]
    %v426 = vld [vmem:[#allocation7 + $0x2c0] sm:$0xff]
    %v427 = vld [vmem:[#allocation7 + $0x2c8] sm:$0xff]
    %v428 = vld [vmem:[#allocation7 + $0x2d0] sm:$0xff]
    %v429 = vld [vmem:[#allocation7 + $0x2d8] sm:$0xff]
    %v430 = vld [vmem:[#allocation7 + $0x2e0] sm:$0xff]
    %v431 = vld [vmem:[#allocation7 + $0x2e8] sm:$0xff]
    %v432 = vld [vmem:[#allocation7 + $0x2f0] sm:$0xff]
    %v433 = vld [vmem:[#allocation7 + $0x2f8] sm:$0xff]
    %v434 = vld [vmem:[#allocation7 + $0x300] sm:$0xff]
    %v435 = vld [vmem:[#allocation7 + $0x308] sm:$0xff]
    %v436 = vld [vmem:[#allocation7 + $0x310] sm:$0xff]
    %v437 = vld [vmem:[#allocation7 + $0x318] sm:$0xff]
    %v438 = vld [vmem:[#allocation7 + $0x320] sm:$0xff]
    %v439 = vld [vmem:[#allocation7 + $0x328] sm:$0xff]
    %v440 = vld [vmem:[#allocation7 + $0x330] sm:$0xff]
    %v441 = vld [vmem:[#allocation7 + $0x338] sm:$0xff]
    %v442 = vld [vmem:[#allocation7 + $0x340] sm:$0xff]
    %v443 = vld [vmem:[#allocation7 + $0x348] sm:$0xff]
    %v444 = vld [vmem:[#allocation7 + $0x350] sm:$0xff]
    %v445 = vld [vmem:[#allocation7 + $0x358] sm:$0xff]
    %v446 = vld [vmem:[#allocation7 + $0x360] sm:$0xff]
    %v447 = vld [vmem:[#allocation7 + $0x368] sm:$0xff]
    %v448 = vld [vmem:[#allocation7 + $0x370] sm:$0xff]
    %v449 = vld [vmem:[#allocation7 + $0x378] sm:$0xff]
    %v450 = vld [vmem:[#allocation7 + $0x380] sm:$0xff]
    %v451 = vld [vmem:[#allocation7 + $0x388] sm:$0xff]
    %v452 = vld [vmem:[#allocation7 + $0x390] sm:$0xff]
    %v453 = vld [vmem:[#allocation7 + $0x398] sm:$0xff]
    %v454 = vld [vmem:[#allocation7 + $0x3a0] sm:$0xff]
    %v455 = vld [vmem:[#allocation7 + $0x3a8] sm:$0xff]
    %v456 = vld [vmem:[#allocation7 + $0x3b0] sm:$0xff]
    %v457 = vld [vmem:[#allocation7 + $0x3b8] sm:$0xff]
    %v458 = vld [vmem:[#allocation7 + $0x3c0] sm:$0xff]
    %v459 = vld [vmem:[#allocation7 + $0x3c8] sm:$0xff]
    %v460 = vld [vmem:[#allocation7 + $0x3d0] sm:$0xff]
    %v461 = vld [vmem:[#allocation7 + $0x3d8] sm:$0xff]
    %v462 = vld [vmem:[#allocation7 + $0x3e0] sm:$0xff]
    %v463 = vld [vmem:[#allocation7 + $0x3e8] sm:$0xff]
    %v464 = vld [vmem:[#allocation7 + $0x3f0] sm:$0xff]
    %v465 = vld [vmem:[#allocation7 + $0x3f8] sm:$0xff]
    %v466 = vld [vmem:[#allocation7 + $0x400] sm:$0xff]
    %v467 = vld [vmem:[#allocation7 + $0x408] sm:$0xff]
    %v468 = vld [vmem:[#allocation7 + $0x410] sm:$0xff]
    %v469 = vld [vmem:[#allocation7 + $0x418] sm:$0xff]
    %v470 = vld [vmem:[#allocation7 + $0x420] sm:$0xff]
    %v471 = vld [vmem:[#allocation7 + $0x428] sm:$0xff]
    %v472 = vld [vmem:[#allocation7 + $0x430] sm:$0xff]
    %v473 = vld [vmem:[#allocation7 + $0x438] sm:$0xff]
    %v474 = vld [vmem:[#allocation7 + $0x440] sm:$0xff]
    %v475 = vld [vmem:[#allocation7 + $0x448] sm:$0xff]
    %v476 = vld [vmem:[#allocation7 + $0x450] sm:$0xff]
    %v477 = vld [vmem:[#allocation7 + $0x458] sm:$0xff]
    %v478 = vld [vmem:[#allocation7 + $0x460] sm:$0xff]
    %v479 = vld [vmem:[#allocation7 + $0x468] sm:$0xff]
    %v480 = vld [vmem:[#allocation7 + $0x470] sm:$0xff]
    %v481 = vld [vmem:[#allocation7 + $0x478] sm:$0xff]
    %v482 = vld [vmem:[#allocation7 + $0x480] sm:$0xff]
    %v483 = vld [vmem:[#allocation7 + $0x488] sm:$0xff]
    %v484 = vld [vmem:[#allocation7 + $0x490] sm:$0xff]
    %v485 = vld [vmem:[#allocation7 + $0x498] sm:$0xff]
    %v486 = vld [vmem:[#allocation7 + $0x4a0] sm:$0xff]
    %v487 = vld [vmem:[#allocation7 + $0x4a8] sm:$0xff]
    %v488 = vld [vmem:[#allocation7 + $0x4b0] sm:$0xff]
    %v489 = vld [vmem:[#allocation7 + $0x4b8] sm:$0xff]
    %v490 = vld [vmem:[#allocation7 + $0x4c0] sm:$0xff]
    %v491 = vld [vmem:[#allocation7 + $0x4c8] sm:$0xff]
    %v492 = vld [vmem:[#allocation7 + $0x4d0] sm:$0xff]
    %v493 = vld [vmem:[#allocation7 + $0x4d8] sm:$0xff]
    %v494 = vld [vmem:[#allocation7 + $0x4e0] sm:$0xff]
    %v495 = vld [vmem:[#allocation7 + $0x4e8] sm:$0xff]
    %v496 = vld [vmem:[#allocation7 + $0x4f0] sm:$0xff]
    %v497 = vld [vmem:[#allocation7 + $0x4f8] sm:$0xff]
    %v498 = vld [vmem:[#allocation7 + $0x500] sm:$0xff]
    %v499 = vld [vmem:[#allocation7 + $0x508] sm:$0xff]
    %v500 = vld [vmem:[#allocation7 + $0x510] sm:$0xff]
    %v501 = vld [vmem:[#allocation7 + $0x518] sm:$0xff]
    %v502 = vld [vmem:[#allocation7 + $0x520] sm:$0xff]
    %v503 = vld [vmem:[#allocation7 + $0x528] sm:$0xff]
    %v504 = vld [vmem:[#allocation7 + $0x530] sm:$0xff]
    %v505 = vld [vmem:[#allocation7 + $0x538] sm:$0xff]
    %v506 = vld [vmem:[#allocation7 + $0x540] sm:$0xff]
    %v507 = vld [vmem:[#allocation7 + $0x548] sm:$0xff]
    %v508 = vld [vmem:[#allocation7 + $0x550] sm:$0xff]
    %v509 = vld [vmem:[#allocation7 + $0x558] sm:$0xff]
    %v510 = vld [vmem:[#allocation7 + $0x560] sm:$0xff]
    %v511 = vld [vmem:[#allocation7 + $0x568] sm:$0xff]
    %v512 = vld [vmem:[#allocation7 + $0x570] sm:$0xff]
    %v513 = vld [vmem:[#allocation7 + $0x578] sm:$0xff]
    %v514 = vld [vmem:[#allocation7 + $0x580] sm:$0xff]
    %v515 = vld [vmem:[#allocation7 + $0x588] sm:$0xff]
    %v516 = vld [vmem:[#allocation7 + $0x590] sm:$0xff]
    %v517 = vld [vmem:[#allocation7 + $0x598] sm:$0xff]
    %v518 = vld [vmem:[#allocation7 + $0x5a0] sm:$0xff]
    %v519 = vld [vmem:[#allocation7 + $0x5a8] sm:$0xff]
    %v520 = vld [vmem:[#allocation7 + $0x5b0] sm:$0xff]
    %v521 = vld [vmem:[#allocation7 + $0x5b8] sm:$0xff]
    %v522 = vld [vmem:[#allocation7 + $0x5c0] sm:$0xff]
    %v523 = vld [vmem:[#allocation7 + $0x5c8] sm:$0xff]
    %v524 = vld [vmem:[#allocation7 + $0x5d0] sm:$0xff]
    %v525 = vld [vmem:[#allocation7 + $0x5d8] sm:$0xff]
    %v526 = vld [vmem:[#allocation7 + $0x5e0] sm:$0xff]
    %v527 = vld [vmem:[#allocation7 + $0x5e8] sm:$0xff]
    %v528 = vld [vmem:[#allocation7 + $0x5f0] sm:$0xff]
    %v529 = vld [vmem:[#allocation7 + $0x5f8] sm:$0xff]
    %v530 = vld [vmem:[#allocation7 + $0x600] sm:$0xff]
    %v531 = vld [vmem:[#allocation7 + $0x608] sm:$0xff]
    %v532 = vld [vmem:[#allocation7 + $0x610] sm:$0xff]
    %v533 = vld [vmem:[#allocation7 + $0x618] sm:$0xff]
    %v534 = vld [vmem:[#allocation7 + $0x620] sm:$0xff]
    %v535 = vld [vmem:[#allocation7 + $0x628] sm:$0xff]
    %v536 = vld [vmem:[#allocation7 + $0x630] sm:$0xff]
    %v537 = vld [vmem:[#allocation7 + $0x638] sm:$0xff]
    %v538 = vld [vmem:[#allocation7 + $0x640] sm:$0xff]
    %v539 = vld [vmem:[#allocation7 + $0x648] sm:$0xff]
    %v540 = vld [vmem:[#allocation7 + $0x650] sm:$0xff]
    %v541 = vld [vmem:[#allocation7 + $0x658] sm:$0xff]
    %v542 = vld [vmem:[#allocation7 + $0x660] sm:$0xff]
    %v543 = vld [vmem:[#allocation7 + $0x668] sm:$0xff]
    %v544 = vld [vmem:[#allocation7 + $0x670] sm:$0xff]
    %v545 = vld [vmem:[#allocation7 + $0x678] sm:$0xff]
    %v546 = vld [vmem:[#allocation7 + $0x680] sm:$0xff]
    %v547 = vld [vmem:[#allocation7 + $0x688] sm:$0xff]
    %v548 = vld [vmem:[#allocation7 + $0x690] sm:$0xff]
    %v549 = vld [vmem:[#allocation7 + $0x698] sm:$0xff]
    %v550 = vld [vmem:[#allocation7 + $0x6a0] sm:$0xff]
    %v551 = vld [vmem:[#allocation7 + $0x6a8] sm:$0xff]
    %v552 = vld [vmem:[#allocation7 + $0x6b0] sm:$0xff]
    %v553 = vld [vmem:[#allocation7 + $0x6b8] sm:$0xff]
    %v554 = vld [vmem:[#allocation7 + $0x6c0] sm:$0xff]
    %v555 = vld [vmem:[#allocation7 + $0x6c8] sm:$0xff]
    %v556 = vld [vmem:[#allocation7 + $0x6d0] sm:$0xff]
    %v557 = vld [vmem:[#allocation7 + $0x6d8] sm:$0xff]
    %v558 = vld [vmem:[#allocation7 + $0x6e0] sm:$0xff]
    %v559 = vld [vmem:[#allocation7 + $0x6e8] sm:$0xff]
    %v560 = vld [vmem:[#allocation7 + $0x6f0] sm:$0xff]
    %v561 = vld [vmem:[#allocation7 + $0x6f8] sm:$0xff]
    %v562 = vld [vmem:[#allocation7 + $0x700] sm:$0xff]
    %v563 = vld [vmem:[#allocation7 + $0x708] sm:$0xff]
    %v564 = vld [vmem:[#allocation7 + $0x710] sm:$0xff]
    %v565 = vld [vmem:[#allocation7 + $0x718] sm:$0xff]
    %v566 = vld [vmem:[#allocation7 + $0x720] sm:$0xff]
    %v567 = vld [vmem:[#allocation7 + $0x728] sm:$0xff]
    %v568 = vld [vmem:[#allocation7 + $0x730] sm:$0xff]
    %v569 = vld [vmem:[#allocation7 + $0x738] sm:$0xff]
    %v570 = vld [vmem:[#allocation7 + $0x740] sm:$0xff]
    %v571 = vld [vmem:[#allocation7 + $0x748] sm:$0xff]
    %v572 = vld [vmem:[#allocation7 + $0x750] sm:$0xff]
    %v573 = vld [vmem:[#allocation7 + $0x758] sm:$0xff]
    %v574 = vld [vmem:[#allocation7 + $0x760] sm:$0xff]
    %v575 = vld [vmem:[#allocation7 + $0x768] sm:$0xff]
    %v576 = vld [vmem:[#allocation7 + $0x770] sm:$0xff]
    %v577 = vld [vmem:[#allocation7 + $0x778] sm:$0xff]
    %v578 = vld [vmem:[#allocation7 + $0x780] sm:$0xff]
    %v579 = vld [vmem:[#allocation7 + $0x788] sm:$0xff]
    %v580 = vld [vmem:[#allocation7 + $0x790] sm:$0xff]
    %v581 = vld [vmem:[#allocation7 + $0x798] sm:$0xff]
    %v582 = vld [vmem:[#allocation7 + $0x7a0] sm:$0xff]
    %v583 = vld [vmem:[#allocation7 + $0x7a8] sm:$0xff]
    %v584 = vld [vmem:[#allocation7 + $0x7b0] sm:$0xff]
    %v585 = vld [vmem:[#allocation7 + $0x7b8] sm:$0xff]
    %v586 = vld [vmem:[#allocation7 + $0x7c0] sm:$0xff]
    %v587 = vld [vmem:[#allocation7 + $0x7c8] sm:$0xff]
    %v588 = vld [vmem:[#allocation7 + $0x7d0] sm:$0xff]
    %v589 = vld [vmem:[#allocation7 + $0x7d8] sm:$0xff]
    %v590 = vld [vmem:[#allocation7 + $0x7e0] sm:$0xff]
    %v591 = vld [vmem:[#allocation7 + $0x7e8] sm:$0xff]
    %v592 = vld [vmem:[#allocation7 + $0x7f0] sm:$0xff]
    %v593 = vld [vmem:[#allocation7 + $0x7f8] sm:$0xff]
    %v594 = vld [vmem:[%s6] sm:$0xf]
    %v596 = vperm.slane %v594, 0
    %v597 = vperm.slane %v594, 1
    %v598 = vperm.slane %v594, 2
    %v599 = vperm.slane %v594, 3
    %604 = vmatpush.msra.mxu0 %v398
    %605 = vmatpush.msra.mxu0 %v394
    %606 = vmatpush.msra.mxu0 %v390
    %607 = vmatpush.msra.mxu0 %v386
    %608 = vmatpush.msra.mxu0 %v382
    %609 = vmatpush.msra.mxu0 %v378
    %610 = vmatpush.msra.mxu0 %v374
    %611 = vmatpush.msra.mxu0 %v370
    %612 = vmatpush.msra.mxu0 %v366
    %613 = vmatpush.msra.mxu0 %v362
    %614 = vmatpush.msra.mxu0 %v358
    %615 = vmatpush.msra.mxu0 %v354
    %616 = vmatpush.msra.mxu0 %v350
    %617 = vmatpush.msra.mxu0 %v346
    %618 = vmatpush.msra.mxu0 %v342
    %619 = vmatpush.msra.mxu0 %v338
    %620 = vmatmul.f32.gmra.mxu0 %v330
    %v621 = vpop.f32.mrf.mxu0
    %v622 = vadd.f32 %v596, %v621
    %623 = vmatmul.f32.gmra.mxu0 %v334
    %v624 = vpop.f32.mrf.mxu0
    %v625 = vadd.f32 %v596, %v624
    %626 = vdwg.mxu0
    %627 = vmatpush.msra.mxu0 %v462
    %628 = vmatpush.msra.mxu0 %v458
    %629 = vmatpush.msra.mxu0 %v454
    %630 = vmatpush.msra.mxu0 %v450
    %631 = vmatpush.msra.mxu0 %v446
    %632 = vmatpush.msra.mxu0 %v442
    %633 = vmatpush.msra.mxu0 %v438
    %634 = vmatpush.msra.mxu0 %v434
    %635 = vmatpush.msra.mxu0 %v430
    %636 = vmatpush.msra.mxu0 %v426
    %637 = vmatpush.msra.mxu0 %v422
    %638 = vmatpush.msra.mxu0 %v418
    %639 = vmatpush.msra.mxu0 %v414
    %640 = vmatpush.msra.mxu0 %v410
    %641 = vmatpush.msra.mxu0 %v406
    %642 = vmatpush.msra.mxu0 %v402
    %643 = vmatmul.f32.gmra.mxu0 %v331
    %v644 = vpop.f32.mrf.mxu0
    %v645 = vadd.f32 %v622, %v644
    %646 = vmatmul.f32.gmra.mxu0 %v335
    %v647 = vpop.f32.mrf.mxu0
    %v648 = vadd.f32 %v625, %v647
    %649 = vdwg.mxu0
    %650 = vmatpush.msra.mxu0 %v526
    %651 = vmatpush.msra.mxu0 %v522
    %652 = vmatpush.msra.mxu0 %v518
    %653 = vmatpush.msra.mxu0 %v514
    %654 = vmatpush.msra.mxu0 %v510
    %655 = vmatpush.msra.mxu0 %v506
    %656 = vmatpush.msra.mxu0 %v502
    %657 = vmatpush.msra.mxu0 %v498
    %658 = vmatpush.msra.mxu0 %v494
    %659 = vmatpush.msra.mxu0 %v490
    %660 = vmatpush.msra.mxu0 %v486
    %661 = vmatpush.msra.mxu0 %v482
    %662 = vmatpush.msra.mxu0 %v478
    %663 = vmatpush.msra.mxu0 %v474
    %664 = vmatpush.msra.mxu0 %v470
    %665 = vmatpush.msra.mxu0 %v466
    %666 = vmatmul.f32.gmra.mxu0 %v332
    %v667 = vpop.f32.mrf.mxu0
    %v668 = vadd.f32 %v645, %v667
    %669 = vmatmul.f32.gmra.mxu0 %v336
    %v670 = vpop.f32.mrf.mxu0
    %v671 = vadd.f32 %v648, %v670
    %672 = vdwg.mxu0
    %673 = vmatpush.msra.mxu0 %v590
    %674 = vmatpush.msra.mxu0 %v586
    %675 = vmatpush.msra.mxu0 %v582
    %676 = vmatpush.msra.mxu0 %v578
    %677 = vmatpush.msra.mxu0 %v574
    %678 = vmatpush.msra.mxu0 %v570
    %679 = vmatpush.msra.mxu0 %v566
    %680 = vmatpush.msra.mxu0 %v562
    %681 = vmatpush.msra.mxu0 %v558
    %682 = vmatpush.msra.mxu0 %v554
    %683 = vmatpush.msra.mxu0 %v550
    %684 = vmatpush.msra.mxu0 %v546
    %685 = vmatpush.msra.mxu0 %v542
    %686 = vmatpush.msra.mxu0 %v538
    %687 = vmatpush.msra.mxu0 %v534
    %688 = vmatpush.msra.mxu0 %v530
    %689 = vmatmul.f32.gmra.mxu0 %v333
    %v690 = vpop.f32.mrf.mxu0
    %v691 = vadd.f32 %v668, %v690
    %692 = vmatmul.f32.gmra.mxu0 %v337
    %v693 = vpop.f32.mrf.mxu0
    %v694 = vadd.f32 %v671, %v693
    %695 = vdwg.mxu0
    %696 = vmatpush.msra.mxu0 %v399
    %697 = vmatpush.msra.mxu0 %v395
    %698 = vmatpush.msra.mxu0 %v391
    %699 = vmatpush.msra.mxu0 %v387
    %700 = vmatpush.msra.mxu0 %v383
    %701 = vmatpush.msra.mxu0 %v379
    %702 = vmatpush.msra.mxu0 %v375
    %703 = vmatpush.msra.mxu0 %v371
    %704 = vmatpush.msra.mxu0 %v367
    %705 = vmatpush.msra.mxu0 %v363
    %706 = vmatpush.msra.mxu0 %v359
    %707 = vmatpush.msra.mxu0 %v355
    %708 = vmatpush.msra.mxu0 %v351
    %709 = vmatpush.msra.mxu0 %v347
    %710 = vmatpush.msra.mxu0 %v343
    %711 = vmatpush.msra.mxu0 %v339
    %712 = vmatmul.f32.gmra.mxu0 %v330
    %v713 = vpop.f32.mrf.mxu0
    %v714 = vadd.f32 %v597, %v713
    %715 = vmatmul.f32.gmra.mxu0 %v334
    %v716 = vpop.f32.mrf.mxu0
    %v717 = vadd.f32 %v597, %v716
    %718 = vdwg.mxu0
    %719 = vmatpush.msra.mxu0 %v463
    %720 = vmatpush.msra.mxu0 %v459
    %721 = vmatpush.msra.mxu0 %v455
    %722 = vmatpush.msra.mxu0 %v451
    %723 = vmatpush.msra.mxu0 %v447
    %724 = vmatpush.msra.mxu0 %v443
    %725 = vmatpush.msra.mxu0 %v439
    %726 = vmatpush.msra.mxu0 %v435
    %727 = vmatpush.msra.mxu0 %v431
    %728 = vmatpush.msra.mxu0 %v427
    %729 = vmatpush.msra.mxu0 %v423
    %730 = vmatpush.msra.mxu0 %v419
    %731 = vmatpush.msra.mxu0 %v415
    %732 = vmatpush.msra.mxu0 %v411
    %733 = vmatpush.msra.mxu0 %v407
    %734 = vmatpush.msra.mxu0 %v403
    %735 = vmatmul.f32.gmra.mxu0 %v331
    %v736 = vpop.f32.mrf.mxu0
    %v737 = vadd.f32 %v714, %v736
    %738 = vmatmul.f32.gmra.mxu0 %v335
    %v739 = vpop.f32.mrf.mxu0
    %v740 = vadd.f32 %v717, %v739
    %741 = vdwg.mxu0
    %742 = vmatpush.msra.mxu0 %v527
    %743 = vmatpush.msra.mxu0 %v523
    %744 = vmatpush.msra.mxu0 %v519
    %745 = vmatpush.msra.mxu0 %v515
    %746 = vmatpush.msra.mxu0 %v511
    %747 = vmatpush.msra.mxu0 %v507
    %748 = vmatpush.msra.mxu0 %v503
    %749 = vmatpush.msra.mxu0 %v499
    %750 = vmatpush.msra.mxu0 %v495
    %751 = vmatpush.msra.mxu0 %v491
    %752 = vmatpush.msra.mxu0 %v487
    %753 = vmatpush.msra.mxu0 %v483
    %754 = vmatpush.msra.mxu0 %v479
    %755 = vmatpush.msra.mxu0 %v475
    %756 = vmatpush.msra.mxu0 %v471
    %757 = vmatpush.msra.mxu0 %v467
    %758 = vmatmul.f32.gmra.mxu0 %v332
    %v759 = vpop.f32.mrf.mxu0
    %v760 = vadd.f32 %v737, %v759
    %761 = vmatmul.f32.gmra.mxu0 %v336
    %v762 = vpop.f32.mrf.mxu0
    %v763 = vadd.f32 %v740, %v762
    %764 = vdwg.mxu0
    %765 = vmatpush.msra.mxu0 %v591
    %766 = vmatpush.msra.mxu0 %v587
    %767 = vmatpush.msra.mxu0 %v583
    %768 = vmatpush.msra.mxu0 %v579
    %769 = vmatpush.msra.mxu0 %v575
    %770 = vmatpush.msra.mxu0 %v571
    %771 = vmatpush.msra.mxu0 %v567
    %772 = vmatpush.msra.mxu0 %v563
    %773 = vmatpush.msra.mxu0 %v559
    %774 = vmatpush.msra.mxu0 %v555
    %775 = vmatpush.msra.mxu0 %v551
    %776 = vmatpush.msra.mxu0 %v547
    %777 = vmatpush.msra.mxu0 %v543
    %778 = vmatpush.msra.mxu0 %v539
    %779 = vmatpush.msra.mxu0 %v535
    %780 = vmatpush.msra.mxu0 %v531
    %781 = vmatmul.f32.gmra.mxu0 %v333
    %v782 = vpop.f32.mrf.mxu0
    %v783 = vadd.f32 %v760, %v782
    %784 = vmatmul.f32.gmra.mxu0 %v337
    %v785 = vpop.f32.mrf.mxu0
    %v786 = vadd.f32 %v763, %v785
    %787 = vdwg.mxu0
    %788 = vmatpush.msra.mxu0 %v400
    %789 = vmatpush.msra.mxu0 %v396
    %790 = vmatpush.msra.mxu0 %v392
    %791 = vmatpush.msra.mxu0 %v388
    %792 = vmatpush.msra.mxu0 %v384
    %793 = vmatpush.msra.mxu0 %v380
    %794 = vmatpush.msra.mxu0 %v376
    %795 = vmatpush.msra.mxu0 %v372
    %796 = vmatpush.msra.mxu0 %v368
    %797 = vmatpush.msra.mxu0 %v364
    %798 = vmatpush.msra.mxu0 %v360
    %799 = vmatpush.msra.mxu0 %v356
    %800 = vmatpush.msra.mxu0 %v352
    %801 = vmatpush.msra.mxu0 %v348
    %802 = vmatpush.msra.mxu0 %v344
    %803 = vmatpush.msra.mxu0 %v340
    %804 = vmatmul.f32.gmra.mxu0 %v330
    %v805 = vpop.f32.mrf.mxu0
    %v806 = vadd.f32 %v598, %v805
    %807 = vmatmul.f32.gmra.mxu0 %v334
    %v808 = vpop.f32.mrf.mxu0
    %v809 = vadd.f32 %v598, %v808
    %810 = vdwg.mxu0
    %811 = vmatpush.msra.mxu0 %v464
    %812 = vmatpush.msra.mxu0 %v460
    %813 = vmatpush.msra.mxu0 %v456
    %814 = vmatpush.msra.mxu0 %v452
    %815 = vmatpush.msra.mxu0 %v448
    %816 = vmatpush.msra.mxu0 %v444
    %817 = vmatpush.msra.mxu0 %v440
    %818 = vmatpush.msra.mxu0 %v436
    %819 = vmatpush.msra.mxu0 %v432
    %820 = vmatpush.msra.mxu0 %v428
    %821 = vmatpush.msra.mxu0 %v424
    %822 = vmatpush.msra.mxu0 %v420
    %823 = vmatpush.msra.mxu0 %v416
    %824 = vmatpush.msra.mxu0 %v412
    %825 = vmatpush.msra.mxu0 %v408
    %826 = vmatpush.msra.mxu0 %v404
    %827 = vmatmul.f32.gmra.mxu0 %v331
    %v828 = vpop.f32.mrf.mxu0
    %v829 = vadd.f32 %v806, %v828
    %830 = vmatmul.f32.gmra.mxu0 %v335
    %v831 = vpop.f32.mrf.mxu0
    %v832 = vadd.f32 %v809, %v831
    %833 = vdwg.mxu0
    %834 = vmatpush.msra.mxu0 %v528
    %835 = vmatpush.msra.mxu0 %v524
    %836 = vmatpush.msra.mxu0 %v520
    %837 = vmatpush.msra.mxu0 %v516
    %838 = vmatpush.msra.mxu0 %v512
    %839 = vmatpush.msra.mxu0 %v508
    %840 = vmatpush.msra.mxu0 %v504
    %841 = vmatpush.msra.mxu0 %v500
    %842 = vmatpush.msra.mxu0 %v496
    %843 = vmatpush.msra.mxu0 %v492
    %844 = vmatpush.msra.mxu0 %v488
    %845 = vmatpush.msra.mxu0 %v484
    %846 = vmatpush.msra.mxu0 %v480
    %847 = vmatpush.msra.mxu0 %v476
    %848 = vmatpush.msra.mxu0 %v472
    %849 = vmatpush.msra.mxu0 %v468
    %850 = vmatmul.f32.gmra.mxu0 %v332
    %v851 = vpop.f32.mrf.mxu0
    %v852 = vadd.f32 %v829, %v851
    %853 = vmatmul.f32.gmra.mxu0 %v336
    %v854 = vpop.f32.mrf.mxu0
    %v855 = vadd.f32 %v832, %v854
    %856 = vdwg.mxu0
    %857 = vmatpush.msra.mxu0 %v592
    %858 = vmatpush.msra.mxu0 %v588
    %859 = vmatpush.msra.mxu0 %v584
    %860 = vmatpush.msra.mxu0 %v580
    %861 = vmatpush.msra.mxu0 %v576
    %862 = vmatpush.msra.mxu0 %v572
    %863 = vmatpush.msra.mxu0 %v568
    %864 = vmatpush.msra.mxu0 %v564
    %865 = vmatpush.msra.mxu0 %v560
    %866 = vmatpush.msra.mxu0 %v556
    %867 = vmatpush.msra.mxu0 %v552
    %868 = vmatpush.msra.mxu0 %v548
    %869 = vmatpush.msra.mxu0 %v544
    %870 = vmatpush.msra.mxu0 %v540
    %871 = vmatpush.msra.mxu0 %v536
    %872 = vmatpush.msra.mxu0 %v532
    %873 = vmatmul.f32.gmra.mxu0 %v333
    %v874 = vpop.f32.mrf.mxu0
    %v875 = vadd.f32 %v852, %v874
    %876 = vmatmul.f32.gmra.mxu0 %v337
    %v877 = vpop.f32.mrf.mxu0
    %v878 = vadd.f32 %v855, %v877
    %879 = vdwg.mxu0
    %880 = vmatpush.msra.mxu0 %v401
    %881 = vmatpush.msra.mxu0 %v397
    %882 = vmatpush.msra.mxu0 %v393
    %883 = vmatpush.msra.mxu0 %v389
    %884 = vmatpush.msra.mxu0 %v385
    %885 = vmatpush.msra.mxu0 %v381
    %886 = vmatpush.msra.mxu0 %v377
    %887 = vmatpush.msra.mxu0 %v373
    %888 = vmatpush.msra.mxu0 %v369
    %889 = vmatpush.msra.mxu0 %v365
    %890 = vmatpush.msra.mxu0 %v361
    %891 = vmatpush.msra.mxu0 %v357
    %892 = vmatpush.msra.mxu0 %v353
    %893 = vmatpush.msra.mxu0 %v349
    %894 = vmatpush.msra.mxu0 %v345
    %895 = vmatpush.msra.mxu0 %v341
    %896 = vmatmul.f32.gmra.mxu0 %v330
    %v897 = vpop.f32.mrf.mxu0
    %v898 = vadd.f32 %v599, %v897
    %899 = vmatmul.f32.gmra.mxu0 %v334
    %v900 = vpop.f32.mrf.mxu0
    %v901 = vadd.f32 %v599, %v900
    %902 = vdwg.mxu0
    %903 = vmatpush.msra.mxu0 %v465
    %904 = vmatpush.msra.mxu0 %v461
    %905 = vmatpush.msra.mxu0 %v457
    %906 = vmatpush.msra.mxu0 %v453
    %907 = vmatpush.msra.mxu0 %v449
    %908 = vmatpush.msra.mxu0 %v445
    %909 = vmatpush.msra.mxu0 %v441
    %910 = vmatpush.msra.mxu0 %v437
    %911 = vmatpush.msra.mxu0 %v433
    %912 = vmatpush.msra.mxu0 %v429
    %913 = vmatpush.msra.mxu0 %v425
    %914 = vmatpush.msra.mxu0 %v421
    %915 = vmatpush.msra.mxu0 %v417
    %916 = vmatpush.msra.mxu0 %v413
    %917 = vmatpush.msra.mxu0 %v409
    %918 = vmatpush.msra.mxu0 %v405
    %919 = vmatmul.f32.gmra.mxu0 %v331
    %v920 = vpop.f32.mrf.mxu0
    %v921 = vadd.f32 %v898, %v920
    %922 = vmatmul.f32.gmra.mxu0 %v335
    %v923 = vpop.f32.mrf.mxu0
    %v924 = vadd.f32 %v901, %v923
    %925 = vdwg.mxu0
    %926 = vmatpush.msra.mxu0 %v529
    %927 = vmatpush.msra.mxu0 %v525
    %928 = vmatpush.msra.mxu0 %v521
    %929 = vmatpush.msra.mxu0 %v517
    %930 = vmatpush.msra.mxu0 %v513
    %931 = vmatpush.msra.mxu0 %v509
    %932 = vmatpush.msra.mxu0 %v505
    %933 = vmatpush.msra.mxu0 %v501
    %934 = vmatpush.msra.mxu0 %v497
    %935 = vmatpush.msra.mxu0 %v493
    %936 = vmatpush.msra.mxu0 %v489
    %937 = vmatpush.msra.mxu0 %v485
    %938 = vmatpush.msra.mxu0 %v481
    %939 = vmatpush.msra.mxu0 %v477
    %940 = vmatpush.msra.mxu0 %v473
    %941 = vmatpush.msra.mxu0 %v469
    %942 = vmatmul.f32.gmra.mxu0 %v332
    %v943 = vpop.f32.mrf.mxu0
    %v944 = vadd.f32 %v921, %v943
    %945 = vmatmul.f32.gmra.mxu0 %v336
    %v946 = vpop.f32.mrf.mxu0
    %v947 = vadd.f32 %v924, %v946
    %948 = vdwg.mxu0
    %949 = vmatpush.msra.mxu0 %v593
    %950 = vmatpush.msra.mxu0 %v589
    %951 = vmatpush.msra.mxu0 %v585
    %952 = vmatpush.msra.mxu0 %v581
    %953 = vmatpush.msra.mxu0 %v577
    %954 = vmatpush.msra.mxu0 %v573
    %955 = vmatpush.msra.mxu0 %v569
    %956 = vmatpush.msra.mxu0 %v565
    %957 = vmatpush.msra.mxu0 %v561
    %958 = vmatpush.msra.mxu0 %v557
    %959 = vmatpush.msra.mxu0 %v553
    %960 = vmatpush.msra.mxu0 %v549
    %961 = vmatpush.msra.mxu0 %v545
    %962 = vmatpush.msra.mxu0 %v541
    %963 = vmatpush.msra.mxu0 %v537
    %964 = vmatpush.msra.mxu0 %v533
    %965 = vmatmul.f32.gmra.mxu0 %v333
    %v966 = vpop.f32.mrf.mxu0
    %v967 = vadd.f32 %v944, %v966
    %968 = vmatmul.f32.gmra.mxu0 %v337
    %v969 = vpop.f32.mrf.mxu0
    %v970 = vadd.f32 %v947, %v969
    %971 = vdwg.mxu0
    %v972 = vmax.f32 %v691, 0.0
    %v973 = vmax.f32 %v783, 0.0
    %v974 = vmax.f32 %v875, 0.0
    %v975 = vmax.f32 %v967, 0.0
    %v976 = vmax.f32 %v694, 0.0
    %v977 = vmax.f32 %v786, 0.0
    %v978 = vmax.f32 %v878, 0.0
    %v979 = vmax.f32 %v970, 0.0
    %v980 = vld [vmem:[#allocation8] sm:$0xff]
    %v981 = vld [vmem:[#allocation8 + $0x8] sm:$0xff]
    %v982 = vld [vmem:[#allocation8 + $0x10] sm:$0xff]
    %v983 = vld [vmem:[#allocation8 + $0x18] sm:$0xff]
    %v984 = vld [vmem:[#allocation8 + $0x20] sm:$0xff]
    %v985 = vld [vmem:[#allocation8 + $0x28] sm:$0xff]
    %v986 = vld [vmem:[#allocation8 + $0x30] sm:$0xff]
    %v987 = vld [vmem:[#allocation8 + $0x38] sm:$0xff]
    %v988 = vld [vmem:[#allocation8 + $0x40] sm:$0xff]
    %v989 = vld [vmem:[#allocation8 + $0x48] sm:$0xff]
    %v990 = vld [vmem:[#allocation8 + $0x50] sm:$0xff]
    %v991 = vld [vmem:[#allocation8 + $0x58] sm:$0xff]
    %v992 = vld [vmem:[#allocation8 + $0x60] sm:$0xff]
    %v993 = vld [vmem:[#allocation8 + $0x68] sm:$0xff]
    %v994 = vld [vmem:[#allocation8 + $0x70] sm:$0xff]
    %v995 = vld [vmem:[#allocation8 + $0x78] sm:$0xff]
    %v996 = vld [vmem:[#allocation8 + $0x80] sm:$0xff]
    %v997 = vld [vmem:[#allocation8 + $0x88] sm:$0xff]
    %v998 = vld [vmem:[#allocation8 + $0x90] sm:$0xff]
    %v999 = vld [vmem:[#allocation8 + $0x98] sm:$0xff]
    %v1000 = vld [vmem:[#allocation8 + $0xa0] sm:$0xff]
    %v1001 = vld [vmem:[#allocation8 + $0xa8] sm:$0xff]
    %v1002 = vld [vmem:[#allocation8 + $0xb0] sm:$0xff]
    %v1003 = vld [vmem:[#allocation8 + $0xb8] sm:$0xff]
    %v1004 = vld [vmem:[#allocation8 + $0xc0] sm:$0xff]
    %v1005 = vld [vmem:[#allocation8 + $0xc8] sm:$0xff]
    %v1006 = vld [vmem:[#allocation8 + $0xd0] sm:$0xff]
    %v1007 = vld [vmem:[#allocation8 + $0xd8] sm:$0xff]
    %v1008 = vld [vmem:[#allocation8 + $0xe0] sm:$0xff]
    %v1009 = vld [vmem:[#allocation8 + $0xe8] sm:$0xff]
    %v1010 = vld [vmem:[#allocation8 + $0xf0] sm:$0xff]
    %v1011 = vld [vmem:[#allocation8 + $0xf8] sm:$0xff]
    %v1012 = vld [vmem:[#allocation8 + $0x100] sm:$0xff]
    %v1013 = vld [vmem:[#allocation8 + $0x108] sm:$0xff]
    %v1014 = vld [vmem:[#allocation8 + $0x110] sm:$0xff]
    %v1015 = vld [vmem:[#allocation8 + $0x118] sm:$0xff]
    %v1016 = vld [vmem:[#allocation8 + $0x120] sm:$0xff]
    %v1017 = vld [vmem:[#allocation8 + $0x128] sm:$0xff]
    %v1018 = vld [vmem:[#allocation8 + $0x130] sm:$0xff]
    %v1019 = vld [vmem:[#allocation8 + $0x138] sm:$0xff]
    %v1020 = vld [vmem:[#allocation8 + $0x140] sm:$0xff]
    %v1021 = vld [vmem:[#allocation8 + $0x148] sm:$0xff]
    %v1022 = vld [vmem:[#allocation8 + $0x150] sm:$0xff]
    %v1023 = vld [vmem:[#allocation8 + $0x158] sm:$0xff]
    %v1024 = vld [vmem:[#allocation8 + $0x160] sm:$0xff]
    %v1025 = vld [vmem:[#allocation8 + $0x168] sm:$0xff]
    %v1026 = vld [vmem:[#allocation8 + $0x170] sm:$0xff]
    %v1027 = vld [vmem:[#allocation8 + $0x178] sm:$0xff]
    %v1028 = vld [vmem:[#allocation8 + $0x180] sm:$0xff]
    %v1029 = vld [vmem:[#allocation8 + $0x188] sm:$0xff]
    %v1030 = vld [vmem:[#allocation8 + $0x190] sm:$0xff]
    %v1031 = vld [vmem:[#allocation8 + $0x198] sm:$0xff]
    %v1032 = vld [vmem:[#allocation8 + $0x1a0] sm:$0xff]
    %v1033 = vld [vmem:[#allocation8 + $0x1a8] sm:$0xff]
    %v1034 = vld [vmem:[#allocation8 + $0x1b0] sm:$0xff]
    %v1035 = vld [vmem:[#allocation8 + $0x1b8] sm:$0xff]
    %v1036 = vld [vmem:[#allocation8 + $0x1c0] sm:$0xff]
    %v1037 = vld [vmem:[#allocation8 + $0x1c8] sm:$0xff]
    %v1038 = vld [vmem:[#allocation8 + $0x1d0] sm:$0xff]
    %v1039 = vld [vmem:[#allocation8 + $0x1d8] sm:$0xff]
    %v1040 = vld [vmem:[#allocation8 + $0x1e0] sm:$0xff]
    %v1041 = vld [vmem:[#allocation8 + $0x1e8] sm:$0xff]
    %v1042 = vld [vmem:[#allocation8 + $0x1f0] sm:$0xff]
    %v1043 = vld [vmem:[#allocation8 + $0x1f8] sm:$0xff]
    %v1044 = vld [vmem:[%s8] sm:$0x1]
    %v1046 = vperm.slane %v1044, 0
    %1048 = vmatpush.msra.mxu0 %v995
    %1049 = vmatpush.msra.mxu0 %v994
    %1050 = vmatpush.msra.mxu0 %v993
    %1051 = vmatpush.msra.mxu0 %v992
    %1052 = vmatpush.msra.mxu0 %v991
    %1053 = vmatpush.msra.mxu0 %v990
    %1054 = vmatpush.msra.mxu0 %v989
    %1055 = vmatpush.msra.mxu0 %v988
    %1056 = vmatpush.msra.mxu0 %v987
    %1057 = vmatpush.msra.mxu0 %v986
    %1058 = vmatpush.msra.mxu0 %v985
    %1059 = vmatpush.msra.mxu0 %v984
    %1060 = vmatpush.msra.mxu0 %v983
    %1061 = vmatpush.msra.mxu0 %v982
    %1062 = vmatpush.msra.mxu0 %v981
    %1063 = vmatpush.msra.mxu0 %v980
    %1064 = vmatmul.f32.gmra.mxu0 %v972
    %v1065 = vpop.f32.mrf.mxu0
    %v1066 = vadd.f32 %v1046, %v1065
    %1067 = vmatmul.f32.gmra.mxu0 %v976
    %v1068 = vpop.f32.mrf.mxu0
    %v1069 = vadd.f32 %v1046, %v1068
    %1070 = vdwg.mxu0
    %1071 = vmatpush.msra.mxu0 %v1011
    %1072 = vmatpush.msra.mxu0 %v1010
    %1073 = vmatpush.msra.mxu0 %v1009
    %1074 = vmatpush.msra.mxu0 %v1008
    %1075 = vmatpush.msra.mxu0 %v1007
    %1076 = vmatpush.msra.mxu0 %v1006
    %1077 = vmatpush.msra.mxu0 %v1005
    %1078 = vmatpush.msra.mxu0 %v1004
    %1079 = vmatpush.msra.mxu0 %v1003
    %1080 = vmatpush.msra.mxu0 %v1002
    %1081 = vmatpush.msra.mxu0 %v1001
    %1082 = vmatpush.msra.mxu0 %v1000
    %1083 = vmatpush.msra.mxu0 %v999
    %1084 = vmatpush.msra.mxu0 %v998
    %1085 = vmatpush.msra.mxu0 %v997
    %1086 = vmatpush.msra.mxu0 %v996
    %1087 = vmatmul.f32.gmra.mxu0 %v973
    %v1088 = vpop.f32.mrf.mxu0
    %v1089 = vadd.f32 %v1066, %v1088
    %1090 = vmatmul.f32.gmra.mxu0 %v977
    %v1091 = vpop.f32.mrf.mxu0
    %v1092 = vadd.f32 %v1069, %v1091
    %1093 = vdwg.mxu0
    %1094 = vmatpush.msra.mxu0 %v1027
    %1095 = vmatpush.msra.mxu0 %v1026
    %1096 = vmatpush.msra.mxu0 %v1025
    %1097 = vmatpush.msra.mxu0 %v1024
    %1098 = vmatpush.msra.mxu0 %v1023
    %1099 = vmatpush.msra.mxu0 %v1022
    %1100 = vmatpush.msra.mxu0 %v1021
    %1101 = vmatpush.msra.mxu0 %v1020
    %1102 = vmatpush.msra.mxu0 %v1019
    %1103 = vmatpush.msra.mxu0 %v1018
    %1104 = vmatpush.msra.mxu0 %v1017
    %1105 = vmatpush.msra.mxu0 %v1016
    %1106 = vmatpush.msra.mxu0 %v1015
    %1107 = vmatpush.msra.mxu0 %v1014
    %1108 = vmatpush.msra.mxu0 %v1013
    %1109 = vmatpush.msra.mxu0 %v1012
    %1110 = vmatmul.f32.gmra.mxu0 %v974
    %v1111 = vpop.f32.mrf.mxu0
    %v1112 = vadd.f32 %v1089, %v1111
    %1113 = vmatmul.f32.gmra.mxu0 %v978
    %v1114 = vpop.f32.mrf.mxu0
    %v1115 = vadd.f32 %v1092, %v1114
    %1116 = vdwg.mxu0
    %1117 = vmatpush.msra.mxu0 %v1043
    %1118 = vmatpush.msra.mxu0 %v1042
    %1119 = vmatpush.msra.mxu0 %v1041
    %1120 = vmatpush.msra.mxu0 %v1040
    %1121 = vmatpush.msra.mxu0 %v1039
    %1122 = vmatpush.msra.mxu0 %v1038
    %1123 = vmatpush.msra.mxu0 %v1037
    %1124 = vmatpush.msra.mxu0 %v1036
    %1125 = vmatpush.msra.mxu0 %v1035
    %1126 = vmatpush.msra.mxu0 %v1034
    %1127 = vmatpush.msra.mxu0 %v1033
    %1128 = vmatpush.msra.mxu0 %v1032
    %1129 = vmatpush.msra.mxu0 %v1031
    %1130 = vmatpush.msra.mxu0 %v1030
    %1131 = vmatpush.msra.mxu0 %v1029
    %1132 = vmatpush.msra.mxu0 %v1028
    %1133 = vmatmul.f32.gmra.mxu0 %v975
    %v1134 = vpop.f32.mrf.mxu0
    %v1135 = vadd.f32 %v1112, %v1134
    %1136 = vmatmul.f32.gmra.mxu0 %v979
    %v1137 = vpop.f32.mrf.mxu0
    %v1138 = vadd.f32 %v1115, %v1137
    %1139 = vdwg.mxu0
    %1140 = vst [vmem:[#allocation10] sm:$0xff] %v1135
    %1141 = vst [vmem:[#allocation10 + $0x8] sm:$0xff] %v1138
    // Predicated region
    $region54: #{tpu_custom_call.1} parent=1 // pred_check
      _
    $region55: #{tpu_custom_call.1} parent=1 // pred_check_branch
      %1143 = sbr.rel (0) target = $region57
    $region56: #{tpu_custom_call.1} parent=1 // pred_region
      %1145 = vsyncadd [#allocation4], 0
      %s1146 = sshll.u32 [#allocation10], 4
      %s1147 = int_to_ptr.vmem [resolvable:$true] %s1146
      %s1148 = sshll.u32 %s9, 4
      %s1149 = int_to_ptr.hbm [resolvable:$true] %s1148
      %1154 = dma.vmem_to_hbm [thread:$0]  %s1147, 256, %s1149, [#allocation4], 128, 128, 8
    $region57: #{tpu_custom_call.1} parent=1 // pred_fallthru
      _
    // Predicated region
    $region58: #{tpu_custom_call.1} parent=1 // pred_check
      _
    $region59: #{tpu_custom_call.1} parent=1 // pred_check_branch
      %1156 = sbr.rel (0) target = $region61
    $region60: #{tpu_custom_call.1} parent=1 // pred_region
      %1158 = dma.done [#allocation4], 256
    $region61: #{tpu_custom_call.1} parent=1 // pred_fallthru
      _
    %1159 = vsyncpa [#allocation3], 1
    %1160 = vsyncpa [#allocation6], 1
    %1161 = vsyncpa [#allocation9], 1
    %1162 = vsyncpa [#allocation4], 1

</llo_original>
